<compile_context>
chip_gen: v7x
topology: tpu7x:2x2x1
jax: 0.10.0
libtpu: 0.0.40
codegen_flags: <defaults>
</compile_context>

<pallas_src>
import math

import jax
import jax.numpy as jnp
from jax import lax
from jax.experimental import pallas as pl
from jax.experimental.pallas import tpu as pltpu

LN_EPS = 1e-5  # nn.LayerNorm default


def _merge_kernel(x_ref, we_ref, wo_ref, b_ref, out_ref):
    """Fused 2x2-merge + LayerNorm(4C) + Linear(4C -> tn) on one (row, N) tile.

    x_ref  : (tr, 2, Wh, 2C)  contiguous pair of image rows per merged row;
                              [:, 0] = even rows -> channels [x0|x2],
                              [:, 1] = odd  rows -> channels [x1|x3]
    we/wo  : (2C, tn)         gamma-folded halves of the (4C, n_out) weight
    b_ref  : (1, tn)          beta @ weight (f32)
    out_ref: (tr*Wh, tn)
    """
    f32 = jnp.float32
    e = x_ref[:, 0, :, :].astype(f32)          # (tr, Wh, 2C)
    o = x_ref[:, 1, :, :].astype(f32)          # (tr, Wh, 2C)
    tr, wh, c2 = e.shape
    inv_c4 = 1.0 / (2 * c2)

    # LayerNorm statistics over the full 4C feature (split across e and o).
    mean = (jnp.sum(e, axis=-1, keepdims=True)
            + jnp.sum(o, axis=-1, keepdims=True)) * inv_c4
    ec = e - mean
    oc = o - mean
    var = (jnp.sum(ec * ec, axis=-1, keepdims=True)
           + jnp.sum(oc * oc, axis=-1, keepdims=True)) * inv_c4
    rstd = lax.rsqrt(var + LN_EPS)

    # gamma/beta were folded into we/wo/b in the wrapper: only center & scale.
    rows = tr * wh
    wdt = we_ref.dtype
    # TODO(synk): for Swin's Wh=7/14 (Wh % 8 != 0) this sublane collapse may
    # insert a per-tile relayout; audit with pl.lower_as_mlir and switch to a
    # 3D dot_general / 3D output block if it shows up.
    en2 = (ec * rstd).reshape(rows, c2).astype(wdt)
    on2 = (oc * rstd).reshape(rows, c2).astype(wdt)

    acc = jnp.dot(en2, we_ref[...], preferred_element_type=f32)
    acc = acc + jnp.dot(on2, wo_ref[...], preferred_element_type=f32)
    acc = acc + b_ref[...].astype(f32)
    out_ref[...] = acc.astype(out_ref.dtype)


def _tpu_vmem_and_cores():
    """Best-effort (per-core VMEM capacity bytes, TensorCores per chip)."""
    vmem = 64 << 20  # safe default (v7x per-TC capacity; conservative elsewhere)
    try:
        info = pltpu.get_tpu_info()
        vmem = int(getattr(info, "vmem_capacity_bytes", vmem)) or vmem
    except Exception:
        pass
    kind = ""
    try:
        kind = jax.devices()[0].device_kind.lower().replace(" ", "")
    except Exception:
        pass
    num_tc = 2 if ("v7" in kind or "7x" in kind) else 1
    return vmem, num_tc


def _per_row_bytes(Wh, c2in, tn, x_bytes, w_bytes, out_bytes):
    """Approx VMEM bytes per merged image row (IO double-buffered + temps)."""
    return (2 * (2 * Wh * c2in * x_bytes)        # input tile, double-buffered
            + 2 * (Wh * tn * out_bytes)          # output tile, double-buffered
            + 2 * Wh * c2in * (8 + w_bytes)      # f32 temps + weight-dtype cast
            + Wh * tn * 4)                       # f32 accumulator


def _pick_n_tile(n_out, c2in, w_bytes):
    """Slab-tile n_out when the stationary weight is large (v7x 64 MiB VMEM)."""
    full = 2 * c2in * n_out * w_bytes            # W_e + W_o, one copy
    if full <= (8 << 20) or n_out % 128 != 0:
        return n_out
    tn = max(128, ((4 << 20) // (2 * c2in * w_bytes)) // 128 * 128)
    tn = min(tn, n_out)
    while n_out % tn != 0:                       # prefer an exact divisor
        tn -= 128
    return int(tn)


def _pick_row_tile(M, Wh, c2in, tn, x_bytes, w_bytes, out_bytes, budget, num_tc):
    """Largest merged-image-row tile fitting the VMEM budget."""
    # Stationary params (assume double-buffered by the pipeline) + bias.
    fixed = 2 * (2 * c2in * tn * w_bytes + tn * 4)
    avail = max(budget - fixed, 1 << 20)
    per_row = _per_row_bytes(Wh, c2in, tn, x_bytes, w_bytes, out_bytes)
    tr = max(1, min(M, avail // per_row))

    # Output block leading dim (tr*Wh) must be sublane-aligned unless it spans
    # the full extent (tr == M).
    sub = max(8, 32 // max(1, out_bytes))
    align = sub // math.gcd(Wh, sub)
    if tr < M:
        tr = max(align, (tr // align) * align)

    # Multi-TensorCore chips (v7x): prefer an even number of row-tile steps so
    # the 'parallel' grid axis shards evenly across both cores.  Single-TC
    # chips (v5e/v6e) keep the biggest tile that fits (fewer, larger steps).
    if num_tc >= 2 and M >= 2:
        steps = pl.cdiv(M, min(tr, M))
        if steps % 2 != 0:
            for s in range(steps + 1, steps + 9, 2):     # even candidates
                t = max(align, pl.cdiv(pl.cdiv(M, s), align) * align)
                if t <= M and pl.cdiv(M, t) % 2 == 0:
                    tr = t
                    break
    return int(min(tr, M))


def patch_merging(x, weight, gamma, beta):
    """
    x:      (B, L, C), L = H*W with H == W even
    weight: (4C, 2C)   (torch reduction.weight transposed)
    gamma:  (4C,)      LayerNorm scale
    beta:   (4C,)      LayerNorm bias
    returns (B, L//4, 2C)
    """
    B, L, C = x.shape
    H = W = int(math.sqrt(L))
    assert H * W == L, "L must be a perfect square"
    assert H % 2 == 0 and W % 2 == 0, "H and W must be even"
    Hh, Wh = H // 2, W // 2
    c2in = 2 * C
    n_out = weight.shape[1]
    assert weight.shape[0] == 4 * C

    # Free reshape: (B, H, W, C) -> (B*Hh, 2, Wh, 2C).  For each merged row the
    # even/odd image-row pair is contiguous in HBM => one contiguous DMA per
    # row tile.  Even rows carry channels [x0|x2]; odd rows carry [x1|x3].
    M = B * Hh
    xr = x.reshape(M, 2, Wh, c2in)

    # Fold LayerNorm affine into the permuted weight halves, in f32, then cast.
    f32 = jnp.float32
    w4 = weight.astype(f32).reshape(2, 2, C, n_out)   # [a, b] -> rows of x_{2a+b}
    g4 = gamma.astype(f32).reshape(2, 2, C)
    w_e = (g4[:, 0][..., None] * w4[:, 0]).reshape(c2in, n_out).astype(weight.dtype)
    w_o = (g4[:, 1][..., None] * w4[:, 1]).reshape(c2in, n_out).astype(weight.dtype)
    bias = (beta.astype(f32) @ weight.astype(f32)).reshape(1, n_out)   # stays f32

    out_dtype = x.dtype
    x_bytes = jnp.dtype(x.dtype).itemsize
    w_bytes = jnp.dtype(weight.dtype).itemsize
    out_bytes = jnp.dtype(out_dtype).itemsize

    vmem_cap, num_tc = _tpu_vmem_and_cores()
    budget = vmem_cap // 2                            # generation-aware budget

    tn = _pick_n_tile(n_out, c2in, w_bytes)
    tr = _pick_row_tile(M, Wh, c2in, tn, x_bytes, w_bytes, out_bytes,
                        budget, num_tc)
    gm, gn = pl.cdiv(M, tr), pl.cdiv(n_out, tn)
    grid = (gm, gn)                                   # N innermost: x tile reused

    tokens = M * Wh
    w_reads = gm if gn > 1 else 1
    cost = pl.CostEstimate(
        flops=2 * tokens * (4 * C) * n_out,
        transcendentals=tokens,
        bytes_accessed=(tokens * 4 * C * x_bytes
                        + w_reads * (4 * C) * n_out * w_bytes
                        + tokens * n_out * out_bytes),
    )

    # Scoped VMEM need, capped at the physical per-core capacity.
    est = (2 * (2 * c2in * tn * w_bytes + tn * 4)
           + tr * _per_row_bytes(Wh, c2in, tn, x_bytes, w_bytes, out_bytes)
           + (2 << 20))
    vmem_limit = min(vmem_cap, max(32 << 20, int(est * 1.25)))

    out = pl.pallas_call(
        _merge_kernel,
        out_shape=jax.ShapeDtypeStruct((M * Wh, n_out), out_dtype),
        grid_spec=pltpu.PrefetchScalarGridSpec(
            num_scalar_prefetch=0,
            grid=grid,
            in_specs=[
                # Single contiguous (tr, 2, Wh, 2C) DMA per row tile; constant
                # block index across the inner N axis (fetched once per tile).
                pl.BlockSpec((tr, 2, Wh, c2in), lambda i, j: (i, 0, 0, 0)),
                # Gamma-folded weight halves (slab-tiled along n_out) + bias.
                pl.BlockSpec((c2in, tn), lambda i, j: (0, j)),
                pl.BlockSpec((c2in, tn), lambda i, j: (0, j)),
                pl.BlockSpec((1, tn), lambda i, j: (0, j)),
            ],
            out_specs=pl.BlockSpec((tr * Wh, tn), lambda i, j: (i, j)),
        ),
        compiler_params=pltpu.CompilerParams(
            dimension_semantics=("parallel", "parallel"),
            vmem_limit_bytes=int(vmem_limit),
        ),
        cost_estimate=cost,
    )(xr, w_e, w_o, bias)

    return out.reshape(B, Hh * Wh, n_out)


def _reference(x, weight, gamma, beta):
    """Pure-JAX reference mirroring the PyTorch forward."""
    B, L, C = x.shape
    H = W = int(math.sqrt(L))
    xg = x.reshape(B, H, W, C)
    x0 = xg[:, 0::2, 0::2, :]
    x1 = xg[:, 1::2, 0::2, :]
    x2 = xg[:, 0::2, 1::2, :]
    x3 = xg[:, 1::2, 1::2, :]
    xm = jnp.concatenate([x0, x1, x2, x3], axis=-1).reshape(B, -1, 4 * C)
    mean = jnp.mean(xm, axis=-1, keepdims=True)
    var = jnp.mean((xm - mean) ** 2, axis=-1, keepdims=True)
    xn = (xm - mean) * lax.rsqrt(var + LN_EPS) * gamma + beta
    return jnp.einsum("blk,kn->bln", xn, weight)


if __name__ == "__main__":
    # Small shapes: B=2, C=4, H=W=16  ->  x: (2, 256, 4)
    B, C, H = 2, 4, 16
    L = H * H

    key = jax.random.PRNGKey(0)
    kx, kw, kg, kb = jax.random.split(key, 4)

    x = jax.random.normal(kx, (B, L, C), dtype=jnp.float32)
    # Linear(4C -> 2C, bias=False): weight stored as (4C, 2C) (= torch W.T)
    weight = jax.random.normal(kw, (4 * C, 2 * C), dtype=jnp.float32) * 0.05
    # LayerNorm(4C) affine params (perturbed from default 1/0 so they matter).
    gamma = 1.0 + 0.1 * jax.random.normal(kg, (4 * C,), dtype=jnp.float32)
    beta = 0.1 * jax.random.normal(kb, (4 * C,), dtype=jnp.float32)

    out = patch_merging(x, weight, gamma, beta)
    out = jax.block_until_ready(out)

    ref = _reference(x, weight, gamma, beta)
    assert out.shape == (B, L // 4, 2 * C), out.shape
    assert jnp.allclose(out, ref, atol=1e-4, rtol=1e-4), float(
        jnp.max(jnp.abs(out - ref))
    )

    print("KERNEL_OK")
</pallas_src>

<mosaic_0001>
module attributes {stable_mosaic.version = 11 : i64} {
  func.func @_merge_kernel(%arg0: i32, %arg1: i32, %arg2: memref<16x2x8x8xf32, #tpu.memory_space<vmem>>, %arg3: memref<8x8xf32, #tpu.memory_space<vmem>>, %arg4: memref<8x8xf32, #tpu.memory_space<vmem>>, %arg5: memref<1x8xf32, #tpu.memory_space<vmem>>, %arg6: memref<128x8xf32, #tpu.memory_space<vmem>>) attributes {dimension_semantics = [#tpu.dimension_semantics<parallel>, #tpu.dimension_semantics<parallel>], iteration_bounds = array<i64: 1, 1>, scalar_prefetch = 0 : i64, scratch_operands = 0 : i64, tpu.core_type = #tpu.core_type<tc>, window_params = [{transform_indices = @transform_0, window_bounds = array<i64: 16, 2, 8, 8>}, {transform_indices = @transform_1, window_bounds = array<i64: 8, 8>}, {transform_indices = @transform_2, window_bounds = array<i64: 8, 8>}, {transform_indices = @transform_3, window_bounds = array<i64: 1, 8>}, {transform_indices = @transform_4, window_bounds = array<i64: 128, 8>}]} {
    %c0 = arith.constant 0 : index
    %c0_0 = arith.constant 0 : index
    %c0_1 = arith.constant 0 : index
    %c0_2 = arith.constant 0 : index
    %0 = vector.load %arg2[%c0, %c0_0, %c0_1, %c0_2] : memref<16x2x8x8xf32, #tpu.memory_space<vmem>>, vector<16x1x8x8xf32>
    %1 = vector.shape_cast %0 : vector<16x1x8x8xf32> to vector<16x8x8xf32>
    %c0_3 = arith.constant 0 : index
    %c1 = arith.constant 1 : index
    %c0_4 = arith.constant 0 : index
    %c0_5 = arith.constant 0 : index
    %2 = vector.load %arg2[%c0_3, %c1, %c0_4, %c0_5] : memref<16x2x8x8xf32, #tpu.memory_space<vmem>>, vector<16x1x8x8xf32>
    %3 = vector.shape_cast %2 : vector<16x1x8x8xf32> to vector<16x8x8xf32>
    %cst = arith.constant dense<0.000000e+00> : vector<16x8xf32>
    %4 = vector.multi_reduction <add>, %1, %cst [2] : vector<16x8x8xf32> to vector<16x8xf32>
    %5 = vector.shape_cast %4 : vector<16x8xf32> to vector<16x8x1xf32>
    %cst_6 = arith.constant dense<0.000000e+00> : vector<16x8xf32>
    %6 = vector.multi_reduction <add>, %3, %cst_6 [2] : vector<16x8x8xf32> to vector<16x8xf32>
    %7 = vector.shape_cast %6 : vector<16x8xf32> to vector<16x8x1xf32>
    %8 = arith.addf %5, %7 : vector<16x8x1xf32>
    %cst_7 = arith.constant 6.250000e-02 : f32
    %9 = vector.broadcast %cst_7 : f32 to vector<16x8x1xf32>
    %10 = arith.mulf %8, %9 : vector<16x8x1xf32>
    %11 = vector.broadcast %10 : vector<16x8x1xf32> to vector<16x8x8xf32>
    %12 = arith.subf %1, %11 : vector<16x8x8xf32>
    %13 = vector.broadcast %10 : vector<16x8x1xf32> to vector<16x8x8xf32>
    %14 = arith.subf %3, %13 : vector<16x8x8xf32>
    %15 = arith.mulf %12, %12 : vector<16x8x8xf32>
    %cst_8 = arith.constant dense<0.000000e+00> : vector<16x8xf32>
    %16 = vector.multi_reduction <add>, %15, %cst_8 [2] : vector<16x8x8xf32> to vector<16x8xf32>
    %17 = vector.shape_cast %16 : vector<16x8xf32> to vector<16x8x1xf32>
    %18 = arith.mulf %14, %14 : vector<16x8x8xf32>
    %cst_9 = arith.constant dense<0.000000e+00> : vector<16x8xf32>
    %19 = vector.multi_reduction <add>, %18, %cst_9 [2] : vector<16x8x8xf32> to vector<16x8xf32>
    %20 = vector.shape_cast %19 : vector<16x8xf32> to vector<16x8x1xf32>
    %21 = arith.addf %17, %20 : vector<16x8x1xf32>
    %cst_10 = arith.constant 6.250000e-02 : f32
    %22 = vector.broadcast %cst_10 : f32 to vector<16x8x1xf32>
    %23 = arith.mulf %21, %22 : vector<16x8x1xf32>
    %cst_11 = arith.constant 9.99999974E-6 : f32
    %24 = vector.broadcast %cst_11 : f32 to vector<16x8x1xf32>
    %25 = arith.addf %23, %24 : vector<16x8x1xf32>
    %26 = math.rsqrt %25 : vector<16x8x1xf32>
    %27 = vector.broadcast %26 : vector<16x8x1xf32> to vector<16x8x8xf32>
    %28 = arith.mulf %12, %27 : vector<16x8x8xf32>
    %29 = vector.shape_cast %28 : vector<16x8x8xf32> to vector<128x8xf32>
    %30 = vector.broadcast %26 : vector<16x8x1xf32> to vector<16x8x8xf32>
    %31 = arith.mulf %14, %30 : vector<16x8x8xf32>
    %32 = vector.shape_cast %31 : vector<16x8x8xf32> to vector<128x8xf32>
    %c0_12 = arith.constant 0 : index
    %c0_13 = arith.constant 0 : index
    %33 = vector.load %arg3[%c0_12, %c0_13] : memref<8x8xf32, #tpu.memory_space<vmem>>, vector<8x8xf32>
    %cst_14 = arith.constant dense<0.000000e+00> : vector<128x8xf32>
    %34 = tpu.matmul %29, %33, %cst_14 {dimension_numbers = #tpu.dot_dimension_numbers<[1], [0], [0], [1], [0, 0, 1, 1], [], []>} : vector<128x8xf32>, vector<8x8xf32>, vector<128x8xf32> -> vector<128x8xf32>
    %c0_15 = arith.constant 0 : index
    %c0_16 = arith.constant 0 : index
    %35 = vector.load %arg4[%c0_15, %c0_16] : memref<8x8xf32, #tpu.memory_space<vmem>>, vector<8x8xf32>
    %cst_17 = arith.constant dense<0.000000e+00> : vector<128x8xf32>
    %36 = tpu.matmul %32, %35, %cst_17 {dimension_numbers = #tpu.dot_dimension_numbers<[1], [0], [0], [1], [0, 0, 1, 1], [], []>} : vector<128x8xf32>, vector<8x8xf32>, vector<128x8xf32> -> vector<128x8xf32>
    %37 = arith.addf %34, %36 : vector<128x8xf32>
    %c0_18 = arith.constant 0 : index
    %c0_19 = arith.constant 0 : index
    %38 = vector.load %arg5[%c0_18, %c0_19] : memref<1x8xf32, #tpu.memory_space<vmem>>, vector<1x8xf32>
    %39 = vector.broadcast %38 : vector<1x8xf32> to vector<128x8xf32>
    %40 = arith.addf %37, %39 : vector<128x8xf32>
    %c0_20 = arith.constant 0 : index
    %c0_21 = arith.constant 0 : index
    %41 = vector.load %arg6[%c0_20, %c0_21] : memref<128x8xf32, #tpu.memory_space<vmem>>, vector<128x8xf32>
    tpu.vector_store %arg6[%c0_20, %c0_21], %40 {strides = array<i32>} : memref<128x8xf32, #tpu.memory_space<vmem>>, vector<128x8xf32>,
    return
  }
  func.func @transform_0(%arg0: i32, %arg1: i32) -> (i32, i32, i32, i32) {
    %c0_i32 = arith.constant 0 : i32
    %c0_i32_0 = arith.constant 0 : i32
    %c0_i32_1 = arith.constant 0 : i32
    %c0_i32_2 = arith.constant 0 : i32
    return %arg0, %c0_i32, %c0_i32_0, %c0_i32_1 : i32, i32, i32, i32
  }
  func.func @transform_1(%arg0: i32, %arg1: i32) -> (i32, i32) {
    %c0_i32 = arith.constant 0 : i32
    %c0_i32_0 = arith.constant 0 : i32
    return %c0_i32, %arg1 : i32, i32
  }
  func.func @transform_2(%arg0: i32, %arg1: i32) -> (i32, i32) {
    %c0_i32 = arith.constant 0 : i32
    %c0_i32_0 = arith.constant 0 : i32
    return %c0_i32, %arg1 : i32, i32
  }
  func.func @transform_3(%arg0: i32, %arg1: i32) -> (i32, i32) {
    %c0_i32 = arith.constant 0 : i32
    %c0_i32_0 = arith.constant 0 : i32
    return %c0_i32, %arg1 : i32, i32
  }
  func.func @transform_4(%arg0: i32, %arg1: i32) -> (i32, i32) {
    %c0_i32 = arith.constant 0 : i32
    return %arg0, %arg1 : i32, i32
  }
}

</mosaic_0001>

<llo_original>
// kernel: tpu_custom_call.1
$region0: #{tpu_custom_call.1}
  #allocation0 [shape = 'u32[]', space=smem, size = 0x4, offset = 0x4, fixed_abs, tag = 'smem constant byte address 0x4 - core index']
  #allocation1 [shape = 'u32[144,128]{1,0:T(1,128)}', space=vmem, size = 0x12000, scoped, tag = 'internal scratch']
  %s0 = inlined_call_operand.vmem [shape: f32[16,2,8,8], index: 0, kind: input, shape index: {}]
  %s1 = inlined_call_operand.vmem [shape: f32[8,8], index: 1, kind: input, shape index: {}]
  %s2 = inlined_call_operand.vmem [shape: f32[8,8], index: 2, kind: input, shape index: {}]
  %s3 = inlined_call_operand.vmem [shape: f32[1,8], index: 3, kind: input, shape index: {}]
  %s4 = inlined_call_operand.vmem [shape: f32[128,8], index: 4, kind: output, shape index: {}]
  %s5 = sld [smem:[#allocation0]]
  $region26: #{tpu_custom_call.1} parent=0
    _
  %s7 = ssub.s32 1, %s5
  %s8 = scalar_select 0, %s7, %s5
  // Predicated region
  $region2: #{tpu_custom_call.1} parent=0 // pred_check
    _
  $region3: #{tpu_custom_call.1} parent=0 // pred_check_branch
    %10 = sbr.rel (0) target = $region5
  $region4: #{tpu_custom_call.1} parent=0 // pred_region
    _
  $region5: #{tpu_custom_call.1} parent=0 // pred_fallthru
    _
  // Predicated region
  $region6: #{tpu_custom_call.1} parent=0 // pred_check
    _
  $region7: #{tpu_custom_call.1} parent=0 // pred_check_branch
    %12 = sbr.rel (0) target = $region9
  $region8: #{tpu_custom_call.1} parent=0 // pred_region
    _
  $region9: #{tpu_custom_call.1} parent=0 // pred_fallthru
    _
  // Predicated region
  $region10: #{tpu_custom_call.1} parent=0 // pred_check
    _
  $region11: #{tpu_custom_call.1} parent=0 // pred_check_branch
    %14 = sbr.rel (0) target = $region13
  $region12: #{tpu_custom_call.1} parent=0 // pred_region
    _
  $region13: #{tpu_custom_call.1} parent=0 // pred_fallthru
    _
  // Predicated region
  $region14: #{tpu_custom_call.1} parent=0 // pred_check
    _
  $region15: #{tpu_custom_call.1} parent=0 // pred_check_branch
    %16 = sbr.rel (0) target = $region17
  $region16: #{tpu_custom_call.1} parent=0 // pred_region
    _
  $region17: #{tpu_custom_call.1} parent=0 // pred_fallthru
    _
  %v17 = vld [vmem:[%s0] sm:$0xff]
  %v18 = vld [vmem:[%s0 + $0x10] sm:$0xff]
  %v19 = vld [vmem:[%s0 + $0x20] sm:$0xff]
  %v20 = vld [vmem:[%s0 + $0x30] sm:$0xff]
  %v21 = vld [vmem:[%s0 + $0x40] sm:$0xff]
  %v22 = vld [vmem:[%s0 + $0x50] sm:$0xff]
  %v23 = vld [vmem:[%s0 + $0x60] sm:$0xff]
  %v24 = vld [vmem:[%s0 + $0x70] sm:$0xff]
  %v25 = vld [vmem:[%s0 + $0x80] sm:$0xff]
  %v26 = vld [vmem:[%s0 + $0x90] sm:$0xff]
  %v27 = vld [vmem:[%s0 + $0xa0] sm:$0xff]
  %v28 = vld [vmem:[%s0 + $0xb0] sm:$0xff]
  %v29 = vld [vmem:[%s0 + $0xc0] sm:$0xff]
  %v30 = vld [vmem:[%s0 + $0xd0] sm:$0xff]
  %v31 = vld [vmem:[%s0 + $0xe0] sm:$0xff]
  %v32 = vld [vmem:[%s0 + $0xf0] sm:$0xff]
  %s33 = scalar_lea.vmem %s0, 8
  %v34 = vld [vmem:[%s33] sm:$0xff]
  %v35 = vld [vmem:[%s33 + $0x10] sm:$0xff]
  %v36 = vld [vmem:[%s33 + $0x20] sm:$0xff]
  %v37 = vld [vmem:[%s33 + $0x30] sm:$0xff]
  %v38 = vld [vmem:[%s33 + $0x40] sm:$0xff]
  %v39 = vld [vmem:[%s33 + $0x50] sm:$0xff]
  %v40 = vld [vmem:[%s33 + $0x60] sm:$0xff]
  %v41 = vld [vmem:[%s33 + $0x70] sm:$0xff]
  %v42 = vld [vmem:[%s33 + $0x80] sm:$0xff]
  %v43 = vld [vmem:[%s33 + $0x90] sm:$0xff]
  %v44 = vld [vmem:[%s33 + $0xa0] sm:$0xff]
  %v45 = vld [vmem:[%s33 + $0xb0] sm:$0xff]
  %v46 = vld [vmem:[%s33 + $0xc0] sm:$0xff]
  %v47 = vld [vmem:[%s33 + $0xd0] sm:$0xff]
  %v48 = vld [vmem:[%s33 + $0xe0] sm:$0xff]
  %v49 = vld [vmem:[%s33 + $0xf0] sm:$0xff]
  %vm50 = vcmask 64512
  %v51 = vsel %vm50, %v17, 0.0
  %52 = vadd.xlane.f32.xlu0 %v51
  %v53 = vpop.xlane.xlu0 %52
  %v54 = vsel %vm50, %v18, 0.0
  %55 = vadd.xlane.f32.xlu0 %v54
  %v56 = vpop.xlane.xlu0 %55
  %v57 = vsel %vm50, %v19, 0.0
  %58 = vadd.xlane.f32.xlu0 %v57
  %v59 = vpop.xlane.xlu0 %58
  %v60 = vsel %vm50, %v20, 0.0
  %61 = vadd.xlane.f32.xlu0 %v60
  %v62 = vpop.xlane.xlu0 %61
  %v63 = vsel %vm50, %v21, 0.0
  %64 = vadd.xlane.f32.xlu0 %v63
  %v65 = vpop.xlane.xlu0 %64
  %v66 = vsel %vm50, %v22, 0.0
  %67 = vadd.xlane.f32.xlu0 %v66
  %v68 = vpop.xlane.xlu0 %67
  %v69 = vsel %vm50, %v23, 0.0
  %70 = vadd.xlane.f32.xlu0 %v69
  %v71 = vpop.xlane.xlu0 %70
  %v72 = vsel %vm50, %v24, 0.0
  %73 = vadd.xlane.f32.xlu0 %v72
  %v74 = vpop.xlane.xlu0 %73
  %v75 = vsel %vm50, %v25, 0.0
  %76 = vadd.xlane.f32.xlu0 %v75
  %v77 = vpop.xlane.xlu0 %76
  %v78 = vsel %vm50, %v26, 0.0
  %79 = vadd.xlane.f32.xlu0 %v78
  %v80 = vpop.xlane.xlu0 %79
  %v81 = vsel %vm50, %v27, 0.0
  %82 = vadd.xlane.f32.xlu0 %v81
  %v83 = vpop.xlane.xlu0 %82
  %v84 = vsel %vm50, %v28, 0.0
  %85 = vadd.xlane.f32.xlu0 %v84
  %v86 = vpop.xlane.xlu0 %85
  %v87 = vsel %vm50, %v29, 0.0
  %88 = vadd.xlane.f32.xlu0 %v87
  %v89 = vpop.xlane.xlu0 %88
  %v90 = vsel %vm50, %v30, 0.0
  %91 = vadd.xlane.f32.xlu0 %v90
  %v92 = vpop.xlane.xlu0 %91
  %v93 = vsel %vm50, %v31, 0.0
  %94 = vadd.xlane.f32.xlu0 %v93
  %v95 = vpop.xlane.xlu0 %94
  %v96 = vsel %vm50, %v32, 0.0
  %97 = vadd.xlane.f32.xlu0 %v96
  %v98 = vpop.xlane.xlu0 %97
  %v99 = vsel %vm50, %v34, 0.0
  %100 = vadd.xlane.f32.xlu0 %v99
  %v101 = vpop.xlane.xlu0 %100
  %v102 = vsel %vm50, %v35, 0.0
  %103 = vadd.xlane.f32.xlu0 %v102
  %v104 = vpop.xlane.xlu0 %103
  %v105 = vsel %vm50, %v36, 0.0
  %106 = vadd.xlane.f32.xlu0 %v105
  %v107 = vpop.xlane.xlu0 %106
  %v108 = vsel %vm50, %v37, 0.0
  %109 = vadd.xlane.f32.xlu0 %v108
  %v110 = vpop.xlane.xlu0 %109
  %v111 = vsel %vm50, %v38, 0.0
  %112 = vadd.xlane.f32.xlu0 %v111
  %v113 = vpop.xlane.xlu0 %112
  %v114 = vsel %vm50, %v39, 0.0
  %115 = vadd.xlane.f32.xlu0 %v114
  %v116 = vpop.xlane.xlu0 %115
  %v117 = vsel %vm50, %v40, 0.0
  %118 = vadd.xlane.f32.xlu0 %v117
  %v119 = vpop.xlane.xlu0 %118
  %v120 = vsel %vm50, %v41, 0.0
  %121 = vadd.xlane.f32.xlu0 %v120
  %v122 = vpop.xlane.xlu0 %121
  %v123 = vsel %vm50, %v42, 0.0
  %124 = vadd.xlane.f32.xlu0 %v123
  %v125 = vpop.xlane.xlu0 %124
  %v126 = vsel %vm50, %v43, 0.0
  %127 = vadd.xlane.f32.xlu0 %v126
  %v128 = vpop.xlane.xlu0 %127
  %v129 = vsel %vm50, %v44, 0.0
  %130 = vadd.xlane.f32.xlu0 %v129
  %v131 = vpop.xlane.xlu0 %130
  %v132 = vsel %vm50, %v45, 0.0
  %133 = vadd.xlane.f32.xlu0 %v132
  %v134 = vpop.xlane.xlu0 %133
  %v135 = vsel %vm50, %v46, 0.0
  %136 = vadd.xlane.f32.xlu0 %v135
  %v137 = vpop.xlane.xlu0 %136
  %v138 = vsel %vm50, %v47, 0.0
  %139 = vadd.xlane.f32.xlu0 %v138
  %v140 = vpop.xlane.xlu0 %139
  %v141 = vsel %vm50, %v48, 0.0
  %142 = vadd.xlane.f32.xlu0 %v141
  %v143 = vpop.xlane.xlu0 %142
  %v144 = vsel %vm50, %v49, 0.0
  %145 = vadd.xlane.f32.xlu0 %v144
  %v146 = vpop.xlane.xlu0 %145
  %v147 = vadd.f32 %v53, %v101
  %v148 = vadd.f32 %v56, %v104
  %v149 = vadd.f32 %v59, %v107
  %v150 = vadd.f32 %v62, %v110
  %v151 = vadd.f32 %v65, %v113
  %v152 = vadd.f32 %v68, %v116
  %v153 = vadd.f32 %v71, %v119
  %v154 = vadd.f32 %v74, %v122
  %v155 = vadd.f32 %v77, %v125
  %v156 = vadd.f32 %v80, %v128
  %v157 = vadd.f32 %v83, %v131
  %v158 = vadd.f32 %v86, %v134
  %v159 = vadd.f32 %v89, %v137
  %v160 = vadd.f32 %v92, %v140
  %v161 = vadd.f32 %v95, %v143
  %v162 = vadd.f32 %v98, %v146
  %v163 = vmul.f32 %v147, 0.0625
  %v164 = vmul.f32 %v148, 0.0625
  %v165 = vmul.f32 %v149, 0.0625
  %v166 = vmul.f32 %v150, 0.0625
  %v167 = vmul.f32 %v151, 0.0625
  %v168 = vmul.f32 %v152, 0.0625
  %v169 = vmul.f32 %v153, 0.0625
  %v170 = vmul.f32 %v154, 0.0625
  %v171 = vmul.f32 %v155, 0.0625
  %v172 = vmul.f32 %v156, 0.0625
  %v173 = vmul.f32 %v157, 0.0625
  %v174 = vmul.f32 %v158, 0.0625
  %v175 = vmul.f32 %v159, 0.0625
  %v176 = vmul.f32 %v160, 0.0625
  %v177 = vmul.f32 %v161, 0.0625
  %v178 = vmul.f32 %v162, 0.0625
  %v179 = vsub.f32 %v17, %v163
  %v180 = vsub.f32 %v18, %v164
  %v181 = vsub.f32 %v19, %v165
  %v182 = vsub.f32 %v20, %v166
  %v183 = vsub.f32 %v21, %v167
  %v184 = vsub.f32 %v22, %v168
  %v185 = vsub.f32 %v23, %v169
  %v186 = vsub.f32 %v24, %v170
  %v187 = vsub.f32 %v25, %v171
  %v188 = vsub.f32 %v26, %v172
  %v189 = vsub.f32 %v27, %v173
  %v190 = vsub.f32 %v28, %v174
  %v191 = vsub.f32 %v29, %v175
  %v192 = vsub.f32 %v30, %v176
  %v193 = vsub.f32 %v31, %v177
  %v194 = vsub.f32 %v32, %v178
  %v195 = vsub.f32 %v34, %v163
  %v196 = vsub.f32 %v35, %v164
  %v197 = vsub.f32 %v36, %v165
  %v198 = vsub.f32 %v37, %v166
  %v199 = vsub.f32 %v38, %v167
  %v200 = vsub.f32 %v39, %v168
  %v201 = vsub.f32 %v40, %v169
  %v202 = vsub.f32 %v41, %v170
  %v203 = vsub.f32 %v42, %v171
  %v204 = vsub.f32 %v43, %v172
  %v205 = vsub.f32 %v44, %v173
  %v206 = vsub.f32 %v45, %v174
  %v207 = vsub.f32 %v46, %v175
  %v208 = vsub.f32 %v47, %v176
  %v209 = vsub.f32 %v48, %v177
  %v210 = vsub.f32 %v49, %v178
  %v211 = vmul.f32 %v179, %v179
  %v212 = vmul.f32 %v180, %v180
  %v213 = vmul.f32 %v181, %v181
  %v214 = vmul.f32 %v182, %v182
  %v215 = vmul.f32 %v183, %v183
  %v216 = vmul.f32 %v184, %v184
  %v217 = vmul.f32 %v185, %v185
  %v218 = vmul.f32 %v186, %v186
  %v219 = vmul.f32 %v187, %v187
  %v220 = vmul.f32 %v188, %v188
  %v221 = vmul.f32 %v189, %v189
  %v222 = vmul.f32 %v190, %v190
  %v223 = vmul.f32 %v191, %v191
  %v224 = vmul.f32 %v192, %v192
  %v225 = vmul.f32 %v193, %v193
  %v226 = vmul.f32 %v194, %v194
  %v227 = vsel %vm50, %v211, 0.0
  %228 = vadd.xlane.f32.xlu0 %v227
  %v229 = vpop.xlane.xlu0 %228
  %v230 = vsel %vm50, %v212, 0.0
  %231 = vadd.xlane.f32.xlu0 %v230
  %v232 = vpop.xlane.xlu0 %231
  %v233 = vsel %vm50, %v213, 0.0
  %234 = vadd.xlane.f32.xlu0 %v233
  %v235 = vpop.xlane.xlu0 %234
  %v236 = vsel %vm50, %v214, 0.0
  %237 = vadd.xlane.f32.xlu0 %v236
  %v238 = vpop.xlane.xlu0 %237
  %v239 = vsel %vm50, %v215, 0.0
  %240 = vadd.xlane.f32.xlu0 %v239
  %v241 = vpop.xlane.xlu0 %240
  %v242 = vsel %vm50, %v216, 0.0
  %243 = vadd.xlane.f32.xlu0 %v242
  %v244 = vpop.xlane.xlu0 %243
  %v245 = vsel %vm50, %v217, 0.0
  %246 = vadd.xlane.f32.xlu0 %v245
  %v247 = vpop.xlane.xlu0 %246
  %v248 = vsel %vm50, %v218, 0.0
  %249 = vadd.xlane.f32.xlu0 %v248
  %v250 = vpop.xlane.xlu0 %249
  %v251 = vsel %vm50, %v219, 0.0
  %252 = vadd.xlane.f32.xlu0 %v251
  %v253 = vpop.xlane.xlu0 %252
  %v254 = vsel %vm50, %v220, 0.0
  %255 = vadd.xlane.f32.xlu0 %v254
  %v256 = vpop.xlane.xlu0 %255
  %v257 = vsel %vm50, %v221, 0.0
  %258 = vadd.xlane.f32.xlu0 %v257
  %v259 = vpop.xlane.xlu0 %258
  %v260 = vsel %vm50, %v222, 0.0
  %261 = vadd.xlane.f32.xlu0 %v260
  %v262 = vpop.xlane.xlu0 %261
  %v263 = vsel %vm50, %v223, 0.0
  %264 = vadd.xlane.f32.xlu0 %v263
  %v265 = vpop.xlane.xlu0 %264
  %v266 = vsel %vm50, %v224, 0.0
  %267 = vadd.xlane.f32.xlu0 %v266
  %v268 = vpop.xlane.xlu0 %267
  %v269 = vsel %vm50, %v225, 0.0
  %270 = vadd.xlane.f32.xlu0 %v269
  %v271 = vpop.xlane.xlu0 %270
  %v272 = vsel %vm50, %v226, 0.0
  %273 = vadd.xlane.f32.xlu0 %v272
  %v274 = vpop.xlane.xlu0 %273
  %v275 = vmul.f32 %v195, %v195
  %v276 = vmul.f32 %v196, %v196
  %v277 = vmul.f32 %v197, %v197
  %v278 = vmul.f32 %v198, %v198
  %v279 = vmul.f32 %v199, %v199
  %v280 = vmul.f32 %v200, %v200
  %v281 = vmul.f32 %v201, %v201
  %v282 = vmul.f32 %v202, %v202
  %v283 = vmul.f32 %v203, %v203
  %v284 = vmul.f32 %v204, %v204
  %v285 = vmul.f32 %v205, %v205
  %v286 = vmul.f32 %v206, %v206
  %v287 = vmul.f32 %v207, %v207
  %v288 = vmul.f32 %v208, %v208
  %v289 = vmul.f32 %v209, %v209
  %v290 = vmul.f32 %v210, %v210
  %v291 = vsel %vm50, %v275, 0.0
  %292 = vadd.xlane.f32.xlu0 %v291
  %v293 = vpop.xlane.xlu0 %292
  %v294 = vsel %vm50, %v276, 0.0
  %295 = vadd.xlane.f32.xlu0 %v294
  %v296 = vpop.xlane.xlu0 %295
  %v297 = vsel %vm50, %v277, 0.0
  %298 = vadd.xlane.f32.xlu0 %v297
  %v299 = vpop.xlane.xlu0 %298
  %v300 = vsel %vm50, %v278, 0.0
  %301 = vadd.xlane.f32.xlu0 %v300
  %v302 = vpop.xlane.xlu0 %301
  %v303 = vsel %vm50, %v279, 0.0
  %304 = vadd.xlane.f32.xlu0 %v303
  %v305 = vpop.xlane.xlu0 %304
  %v306 = vsel %vm50, %v280, 0.0
  %307 = vadd.xlane.f32.xlu0 %v306
  %v308 = vpop.xlane.xlu0 %307
  %v309 = vsel %vm50, %v281, 0.0
  %310 = vadd.xlane.f32.xlu0 %v309
  %v311 = vpop.xlane.xlu0 %310
  %v312 = vsel %vm50, %v282, 0.0
  %313 = vadd.xlane.f32.xlu0 %v312
  %v314 = vpop.xlane.xlu0 %313
  %v315 = vsel %vm50, %v283, 0.0
  %316 = vadd.xlane.f32.xlu0 %v315
  %v317 = vpop.xlane.xlu0 %316
  %v318 = vsel %vm50, %v284, 0.0
  %319 = vadd.xlane.f32.xlu0 %v318
  %v320 = vpop.xlane.xlu0 %319
  %v321 = vsel %vm50, %v285, 0.0
  %322 = vadd.xlane.f32.xlu0 %v321
  %v323 = vpop.xlane.xlu0 %322
  %v324 = vsel %vm50, %v286, 0.0
  %325 = vadd.xlane.f32.xlu0 %v324
  %v326 = vpop.xlane.xlu0 %325
  %v327 = vsel %vm50, %v287, 0.0
  %328 = vadd.xlane.f32.xlu0 %v327
  %v329 = vpop.xlane.xlu0 %328
  %v330 = vsel %vm50, %v288, 0.0
  %331 = vadd.xlane.f32.xlu0 %v330
  %v332 = vpop.xlane.xlu0 %331
  %v333 = vsel %vm50, %v289, 0.0
  %334 = vadd.xlane.f32.xlu0 %v333
  %v335 = vpop.xlane.xlu0 %334
  %v336 = vsel %vm50, %v290, 0.0
  %337 = vadd.xlane.f32.xlu0 %v336
  %v338 = vpop.xlane.xlu0 %337
  %v339 = vadd.f32 %v229, %v293
  %v340 = vadd.f32 %v232, %v296
  %v341 = vadd.f32 %v235, %v299
  %v342 = vadd.f32 %v238, %v302
  %v343 = vadd.f32 %v241, %v305
  %v344 = vadd.f32 %v244, %v308
  %v345 = vadd.f32 %v247, %v311
  %v346 = vadd.f32 %v250, %v314
  %v347 = vadd.f32 %v253, %v317
  %v348 = vadd.f32 %v256, %v320
  %v349 = vadd.f32 %v259, %v323
  %v350 = vadd.f32 %v262, %v326
  %v351 = vadd.f32 %v265, %v329
  %v352 = vadd.f32 %v268, %v332
  %v353 = vadd.f32 %v271, %v335
  %v354 = vadd.f32 %v274, %v338
  %v355 = vmul.f32 %v339, 0.0625
  %v356 = vmul.f32 %v340, 0.0625
  %v357 = vmul.f32 %v341, 0.0625
  %v358 = vmul.f32 %v342, 0.0625
  %v359 = vmul.f32 %v343, 0.0625
  %v360 = vmul.f32 %v344, 0.0625
  %v361 = vmul.f32 %v345, 0.0625
  %v362 = vmul.f32 %v346, 0.0625
  %v363 = vmul.f32 %v347, 0.0625
  %v364 = vmul.f32 %v348, 0.0625
  %v365 = vmul.f32 %v349, 0.0625
  %v366 = vmul.f32 %v350, 0.0625
  %v367 = vmul.f32 %v351, 0.0625
  %v368 = vmul.f32 %v352, 0.0625
  %v369 = vmul.f32 %v353, 0.0625
  %v370 = vmul.f32 %v354, 0.0625
  %v371 = vadd.f32 %v355, 1e-05
  %v372 = vadd.f32 %v356, 1e-05
  %v373 = vadd.f32 %v357, 1e-05
  %v374 = vadd.f32 %v358, 1e-05
  %v375 = vadd.f32 %v359, 1e-05
  %v376 = vadd.f32 %v360, 1e-05
  %v377 = vadd.f32 %v361, 1e-05
  %v378 = vadd.f32 %v362, 1e-05
  %v379 = vadd.f32 %v363, 1e-05
  %v380 = vadd.f32 %v364, 1e-05
  %v381 = vadd.f32 %v365, 1e-05
  %v382 = vadd.f32 %v366, 1e-05
  %v383 = vadd.f32 %v367, 1e-05
  %v384 = vadd.f32 %v368, 1e-05
  %v385 = vadd.f32 %v369, 1e-05
  %v386 = vadd.f32 %v370, 1e-05
  %v387 = vrsqrt.pop %v371
  %v388 = vrsqrt.pop %v372
  %v389 = vrsqrt.pop %v373
  %v390 = vrsqrt.pop %v374
  %v391 = vrsqrt.pop %v375
  %v392 = vrsqrt.pop %v376
  %v393 = vrsqrt.pop %v377
  %v394 = vrsqrt.pop %v378
  %v395 = vrsqrt.pop %v379
  %v396 = vrsqrt.pop %v380
  %v397 = vrsqrt.pop %v381
  %v398 = vrsqrt.pop %v382
  %v399 = vrsqrt.pop %v383
  %v400 = vrsqrt.pop %v384
  %v401 = vrsqrt.pop %v385
  %v402 = vrsqrt.pop %v386
  %v403 = vmul.f32 %v179, %v387
  %v404 = vmul.f32 %v180, %v388
  %v405 = vmul.f32 %v181, %v389
  %v406 = vmul.f32 %v182, %v390
  %v407 = vmul.f32 %v183, %v391
  %v408 = vmul.f32 %v184, %v392
  %v409 = vmul.f32 %v185, %v393
  %v410 = vmul.f32 %v186, %v394
  %v411 = vmul.f32 %v187, %v395
  %v412 = vmul.f32 %v188, %v396
  %v413 = vmul.f32 %v189, %v397
  %v414 = vmul.f32 %v190, %v398
  %v415 = vmul.f32 %v191, %v399
  %v416 = vmul.f32 %v192, %v400
  %v417 = vmul.f32 %v193, %v401
  %v418 = vmul.f32 %v194, %v402
  %v419 = vmul.f32 %v195, %v387
  %v420 = vmul.f32 %v196, %v388
  %v421 = vmul.f32 %v197, %v389
  %v422 = vmul.f32 %v198, %v390
  %v423 = vmul.f32 %v199, %v391
  %v424 = vmul.f32 %v200, %v392
  %v425 = vmul.f32 %v201, %v393
  %v426 = vmul.f32 %v202, %v394
  %v427 = vmul.f32 %v203, %v395
  %v428 = vmul.f32 %v204, %v396
  %v429 = vmul.f32 %v205, %v397
  %v430 = vmul.f32 %v206, %v398
  %v431 = vmul.f32 %v207, %v399
  %v432 = vmul.f32 %v208, %v400
  %v433 = vmul.f32 %v209, %v401
  %v434 = vmul.f32 %v210, %v402
  %v435 = vld [vmem:[%s1] sm:$0xff]
  %v436 = vld [vmem:[%s2] sm:$0xff]
  %v438 = vsel %vm50, %v419, 0
  %v441 = vsel %vm50, %v420, 0
  %v444 = vsel %vm50, %v421, 0
  %v447 = vsel %vm50, %v422, 0
  %v450 = vsel %vm50, %v423, 0
  %v453 = vsel %vm50, %v424, 0
  %v456 = vsel %vm50, %v425, 0
  %v459 = vsel %vm50, %v426, 0
  %v462 = vsel %vm50, %v427, 0
  %v465 = vsel %vm50, %v428, 0
  %v468 = vsel %vm50, %v429, 0
  %v471 = vsel %vm50, %v430, 0
  %v474 = vsel %vm50, %v431, 0
  %v477 = vsel %vm50, %v432, 0
  %v480 = vsel %vm50, %v433, 0
  %v483 = vsel %vm50, %v434, 0
  %485 = vmatprep.subr.mxu0 0.0
  %486 = vmatpush1.msra.mxu0 %v436
  %487 = vmatprep.subr.mxu0 0.0
  %488 = vmatpush1.msra.mxu0 0.0
  %489 = vmatprep.subr.mxu0 0.0
  %490 = vmatpush1.msra.mxu0 0.0
  %491 = vmatprep.subr.mxu0 0.0
  %492 = vmatpush1.msra.mxu0 0.0
  %493 = vmatprep.subr.mxu0 0.0
  %494 = vmatpush1.msra.mxu0 0.0
  %495 = vmatprep.subr.mxu0 0.0
  %496 = vmatpush1.msra.mxu0 0.0
  %497 = vmatprep.subr.mxu0 0.0
  %498 = vmatpush1.msra.mxu0 0.0
  %499 = vmatprep.subr.mxu0 0.0
  %500 = vmatpush1.msra.mxu0 0.0
  %501 = vmatprep.subr.mxu0 0.0
  %502 = vmatpush1.msra.mxu0 0.0
  %503 = vmatprep.subr.mxu0 0.0
  %504 = vmatpush1.msra.mxu0 0.0
  %505 = vmatprep.subr.mxu0 0.0
  %506 = vmatpush1.msra.mxu0 0.0
  %507 = vmatprep.subr.mxu0 0.0
  %508 = vmatpush1.msra.mxu0 0.0
  %509 = vmatprep.subr.mxu0 0.0
  %510 = vmatpush1.msra.mxu0 0.0
  %511 = vmatprep.subr.mxu0 0.0
  %512 = vmatpush1.msra.mxu0 0.0
  %513 = vmatprep.subr.mxu0 0.0
  %514 = vmatpush1.msra.mxu0 0.0
  %515 = vmatprep.subr.mxu0 0.0
  %516 = vmatpush1.msra.mxu0 0.0
  %517 = vmatprep.subr.mxu0 0.0
  %518 = vmatpush1.msra.mxu0 0.0
  %519 = vmatprep.subr.mxu0 0.0
  %520 = vmatpush1.msra.mxu0 0.0
  %521 = vmatprep.subr.mxu0 0.0
  %522 = vmatpush1.msra.mxu0 0.0
  %523 = vmatprep.subr.mxu0 0.0
  %524 = vmatpush1.msra.mxu0 0.0
  %525 = vmatprep.subr.mxu0 0.0
  %526 = vmatpush1.msra.mxu0 0.0
  %527 = vmatprep.subr.mxu0 0.0
  %528 = vmatpush1.msra.mxu0 0.0
  %529 = vmatprep.subr.mxu0 0.0
  %530 = vmatpush1.msra.mxu0 0.0
  %531 = vmatprep.subr.mxu0 0.0
  %532 = vmatpush1.msra.mxu0 0.0
  %533 = vmatprep.subr.mxu0 0.0
  %534 = vmatpush1.msra.mxu0 0.0
  %535 = vmatprep.subr.mxu0 0.0
  %536 = vmatpush1.msra.mxu0 0.0
  %537 = vmatprep.subr.mxu0 0.0
  %538 = vmatpush1.msra.mxu0 0.0
  %539 = vmatprep.subr.mxu0 0.0
  %540 = vmatpush1.msra.mxu0 0.0
  %541 = vmatprep.subr.mxu0 0.0
  %542 = vmatpush1.msra.mxu0 0.0
  %543 = vmatprep.subr.mxu0 0.0
  %544 = vmatpush1.msra.mxu0 0.0
  %545 = vmatprep.subr.mxu0 0.0
  %546 = vmatpush1.msra.mxu0 0.0
  %547 = vmatprep.subr.mxu0 0.0
  %548 = vmatpush1.msra.mxu0 0.0
  %549 = vmatprep.mubr.f32.mxu0 0.0
  %550 = vmatmul.mubr.f32.gmra.mrb[0].mxu0 %v438
  %v551 = vpop.f32.mrb[0].mxu0
  %v552 = vadd.f32 0.0, %v551
  %v553 = vpop.f32.mrb[0].mxu0
  %554 = vmatprep.mubr.f32.mxu0 0.0
  %555 = vmatmul.mubr.f32.gmra.mrb[0].mxu0 %v441
  %v556 = vpop.f32.mrb[0].mxu0
  %v557 = vadd.f32 0.0, %v556
  %v558 = vpop.f32.mrb[0].mxu0
  %559 = vmatprep.mubr.f32.mxu0 0.0
  %560 = vmatmul.mubr.f32.gmra.mrb[0].mxu0 %v444
  %v561 = vpop.f32.mrb[0].mxu0
  %v562 = vadd.f32 0.0, %v561
  %v563 = vpop.f32.mrb[0].mxu0
  %564 = vmatprep.mubr.f32.mxu0 0.0
  %565 = vmatmul.mubr.f32.gmra.mrb[0].mxu0 %v447
  %v566 = vpop.f32.mrb[0].mxu0
  %v567 = vadd.f32 0.0, %v566
  %v568 = vpop.f32.mrb[0].mxu0
  %569 = vmatprep.mubr.f32.mxu0 0.0
  %570 = vmatmul.mubr.f32.gmra.mrb[0].mxu0 %v450
  %v571 = vpop.f32.mrb[0].mxu0
  %v572 = vadd.f32 0.0, %v571
  %v573 = vpop.f32.mrb[0].mxu0
  %574 = vmatprep.mubr.f32.mxu0 0.0
  %575 = vmatmul.mubr.f32.gmra.mrb[0].mxu0 %v453
  %v576 = vpop.f32.mrb[0].mxu0
  %v577 = vadd.f32 0.0, %v576
  %v578 = vpop.f32.mrb[0].mxu0
  %579 = vmatprep.mubr.f32.mxu0 0.0
  %580 = vmatmul.mubr.f32.gmra.mrb[0].mxu0 %v456
  %v581 = vpop.f32.mrb[0].mxu0
  %v582 = vadd.f32 0.0, %v581
  %v583 = vpop.f32.mrb[0].mxu0
  %584 = vmatprep.mubr.f32.mxu0 0.0
  %585 = vmatmul.mubr.f32.gmra.mrb[0].mxu0 %v459
  %v586 = vpop.f32.mrb[0].mxu0
  %v587 = vadd.f32 0.0, %v586
  %v588 = vpop.f32.mrb[0].mxu0
  %589 = vmatprep.mubr.f32.mxu0 0.0
  %590 = vmatmul.mubr.f32.gmra.mrb[0].mxu0 %v462
  %v591 = vpop.f32.mrb[0].mxu0
  %v592 = vadd.f32 0.0, %v591
  %v593 = vpop.f32.mrb[0].mxu0
  %594 = vmatprep.mubr.f32.mxu0 0.0
  %595 = vmatmul.mubr.f32.gmra.mrb[0].mxu0 %v465
  %v596 = vpop.f32.mrb[0].mxu0
  %v597 = vadd.f32 0.0, %v596
  %v598 = vpop.f32.mrb[0].mxu0
  %599 = vmatprep.mubr.f32.mxu0 0.0
  %600 = vmatmul.mubr.f32.gmra.mrb[0].mxu0 %v468
  %v601 = vpop.f32.mrb[0].mxu0
  %v602 = vadd.f32 0.0, %v601
  %v603 = vpop.f32.mrb[0].mxu0
  %604 = vmatprep.mubr.f32.mxu0 0.0
  %605 = vmatmul.mubr.f32.gmra.mrb[0].mxu0 %v471
  %v606 = vpop.f32.mrb[0].mxu0
  %v607 = vadd.f32 0.0, %v606
  %v608 = vpop.f32.mrb[0].mxu0
  %609 = vmatprep.mubr.f32.mxu0 0.0
  %610 = vmatmul.mubr.f32.gmra.mrb[0].mxu0 %v474
  %v611 = vpop.f32.mrb[0].mxu0
  %v612 = vadd.f32 0.0, %v611
  %v613 = vpop.f32.mrb[0].mxu0
  %614 = vmatprep.mubr.f32.mxu0 0.0
  %615 = vmatmul.mubr.f32.gmra.mrb[0].mxu0 %v477
  %v616 = vpop.f32.mrb[0].mxu0
  %v617 = vadd.f32 0.0, %v616
  %v618 = vpop.f32.mrb[0].mxu0
  %619 = vmatprep.mubr.f32.mxu0 0.0
  %620 = vmatmul.mubr.f32.gmra.mrb[0].mxu0 %v480
  %v621 = vpop.f32.mrb[0].mxu0
  %v622 = vadd.f32 0.0, %v621
  %v623 = vpop.f32.mrb[0].mxu0
  %624 = vmatprep.mubr.f32.mxu0 0.0
  %625 = vmatmul.mubr.f32.gmra.mrb[0].mxu0 %v483
  %v626 = vpop.f32.mrb[0].mxu0
  %v627 = vadd.f32 0.0, %v626
  %v628 = vpop.f32.mrb[0].mxu0
  %629 = vdwg.mxu0
  %v631 = vsel %vm50, %v403, 0
  %v634 = vsel %vm50, %v404, 0
  %v637 = vsel %vm50, %v405, 0
  %v640 = vsel %vm50, %v406, 0
  %v643 = vsel %vm50, %v407, 0
  %v646 = vsel %vm50, %v408, 0
  %v649 = vsel %vm50, %v409, 0
  %v652 = vsel %vm50, %v410, 0
  %v655 = vsel %vm50, %v411, 0
  %v658 = vsel %vm50, %v412, 0
  %v661 = vsel %vm50, %v413, 0
  %v664 = vsel %vm50, %v414, 0
  %v667 = vsel %vm50, %v415, 0
  %v670 = vsel %vm50, %v416, 0
  %v673 = vsel %vm50, %v417, 0
  %v676 = vsel %vm50, %v418, 0
  %678 = vmatprep.subr.mxu0 0.0
  %679 = vmatpush1.msra.mxu0 %v435
  %680 = vmatprep.subr.mxu0 0.0
  %681 = vmatpush1.msra.mxu0 0.0
  %682 = vmatprep.subr.mxu0 0.0
  %683 = vmatpush1.msra.mxu0 0.0
  %684 = vmatprep.subr.mxu0 0.0
  %685 = vmatpush1.msra.mxu0 0.0
  %686 = vmatprep.subr.mxu0 0.0
  %687 = vmatpush1.msra.mxu0 0.0
  %688 = vmatprep.subr.mxu0 0.0
  %689 = vmatpush1.msra.mxu0 0.0
  %690 = vmatprep.subr.mxu0 0.0
  %691 = vmatpush1.msra.mxu0 0.0
  %692 = vmatprep.subr.mxu0 0.0
  %693 = vmatpush1.msra.mxu0 0.0
  %694 = vmatprep.subr.mxu0 0.0
  %695 = vmatpush1.msra.mxu0 0.0
  %696 = vmatprep.subr.mxu0 0.0
  %697 = vmatpush1.msra.mxu0 0.0
  %698 = vmatprep.subr.mxu0 0.0
  %699 = vmatpush1.msra.mxu0 0.0
  %700 = vmatprep.subr.mxu0 0.0
  %701 = vmatpush1.msra.mxu0 0.0
  %702 = vmatprep.subr.mxu0 0.0
  %703 = vmatpush1.msra.mxu0 0.0
  %704 = vmatprep.subr.mxu0 0.0
  %705 = vmatpush1.msra.mxu0 0.0
  %706 = vmatprep.subr.mxu0 0.0
  %707 = vmatpush1.msra.mxu0 0.0
  %708 = vmatprep.subr.mxu0 0.0
  %709 = vmatpush1.msra.mxu0 0.0
  %710 = vmatprep.subr.mxu0 0.0
  %711 = vmatpush1.msra.mxu0 0.0
  %712 = vmatprep.subr.mxu0 0.0
  %713 = vmatpush1.msra.mxu0 0.0
  %714 = vmatprep.subr.mxu0 0.0
  %715 = vmatpush1.msra.mxu0 0.0
  %716 = vmatprep.subr.mxu0 0.0
  %717 = vmatpush1.msra.mxu0 0.0
  %718 = vmatprep.subr.mxu0 0.0
  %719 = vmatpush1.msra.mxu0 0.0
  %720 = vmatprep.subr.mxu0 0.0
  %721 = vmatpush1.msra.mxu0 0.0
  %722 = vmatprep.subr.mxu0 0.0
  %723 = vmatpush1.msra.mxu0 0.0
  %724 = vmatprep.subr.mxu0 0.0
  %725 = vmatpush1.msra.mxu0 0.0
  %726 = vmatprep.subr.mxu0 0.0
  %727 = vmatpush1.msra.mxu0 0.0
  %728 = vmatprep.subr.mxu0 0.0
  %729 = vmatpush1.msra.mxu0 0.0
  %730 = vmatprep.subr.mxu0 0.0
  %731 = vmatpush1.msra.mxu0 0.0
  %732 = vmatprep.subr.mxu0 0.0
  %733 = vmatpush1.msra.mxu0 0.0
  %734 = vmatprep.subr.mxu0 0.0
  %735 = vmatpush1.msra.mxu0 0.0
  %736 = vmatprep.subr.mxu0 0.0
  %737 = vmatpush1.msra.mxu0 0.0
  %738 = vmatprep.subr.mxu0 0.0
  %739 = vmatpush1.msra.mxu0 0.0
  %740 = vmatprep.subr.mxu0 0.0
  %741 = vmatpush1.msra.mxu0 0.0
  %742 = vmatprep.mubr.f32.mxu0 0.0
  %743 = vmatmul.mubr.f32.gmra.mrb[0].mxu0 %v631
  %v744 = vpop.f32.mrb[0].mxu0
  %v745 = vadd.f32 %v552, %v744
  %v746 = vpop.f32.mrb[0].mxu0
  %747 = vmatprep.mubr.f32.mxu0 0.0
  %748 = vmatmul.mubr.f32.gmra.mrb[0].mxu0 %v634
  %v749 = vpop.f32.mrb[0].mxu0
  %v750 = vadd.f32 %v557, %v749
  %v751 = vpop.f32.mrb[0].mxu0
  %752 = vmatprep.mubr.f32.mxu0 0.0
  %753 = vmatmul.mubr.f32.gmra.mrb[0].mxu0 %v637
  %v754 = vpop.f32.mrb[0].mxu0
  %v755 = vadd.f32 %v562, %v754
  %v756 = vpop.f32.mrb[0].mxu0
  %757 = vmatprep.mubr.f32.mxu0 0.0
  %758 = vmatmul.mubr.f32.gmra.mrb[0].mxu0 %v640
  %v759 = vpop.f32.mrb[0].mxu0
  %v760 = vadd.f32 %v567, %v759
  %v761 = vpop.f32.mrb[0].mxu0
  %762 = vmatprep.mubr.f32.mxu0 0.0
  %763 = vmatmul.mubr.f32.gmra.mrb[0].mxu0 %v643
  %v764 = vpop.f32.mrb[0].mxu0
  %v765 = vadd.f32 %v572, %v764
  %v766 = vpop.f32.mrb[0].mxu0
  %767 = vmatprep.mubr.f32.mxu0 0.0
  %768 = vmatmul.mubr.f32.gmra.mrb[0].mxu0 %v646
  %v769 = vpop.f32.mrb[0].mxu0
  %v770 = vadd.f32 %v577, %v769
  %v771 = vpop.f32.mrb[0].mxu0
  %772 = vmatprep.mubr.f32.mxu0 0.0
  %773 = vmatmul.mubr.f32.gmra.mrb[0].mxu0 %v649
  %v774 = vpop.f32.mrb[0].mxu0
  %v775 = vadd.f32 %v582, %v774
  %v776 = vpop.f32.mrb[0].mxu0
  %777 = vmatprep.mubr.f32.mxu0 0.0
  %778 = vmatmul.mubr.f32.gmra.mrb[0].mxu0 %v652
  %v779 = vpop.f32.mrb[0].mxu0
  %v780 = vadd.f32 %v587, %v779
  %v781 = vpop.f32.mrb[0].mxu0
  %782 = vmatprep.mubr.f32.mxu0 0.0
  %783 = vmatmul.mubr.f32.gmra.mrb[0].mxu0 %v655
  %v784 = vpop.f32.mrb[0].mxu0
  %v785 = vadd.f32 %v592, %v784
  %v786 = vpop.f32.mrb[0].mxu0
  %787 = vmatprep.mubr.f32.mxu0 0.0
  %788 = vmatmul.mubr.f32.gmra.mrb[0].mxu0 %v658
  %v789 = vpop.f32.mrb[0].mxu0
  %v790 = vadd.f32 %v597, %v789
  %v791 = vpop.f32.mrb[0].mxu0
  %792 = vmatprep.mubr.f32.mxu0 0.0
  %793 = vmatmul.mubr.f32.gmra.mrb[0].mxu0 %v661
  %v794 = vpop.f32.mrb[0].mxu0
  %v795 = vadd.f32 %v602, %v794
  %v796 = vpop.f32.mrb[0].mxu0
  %797 = vmatprep.mubr.f32.mxu0 0.0
  %798 = vmatmul.mubr.f32.gmra.mrb[0].mxu0 %v664
  %v799 = vpop.f32.mrb[0].mxu0
  %v800 = vadd.f32 %v607, %v799
  %v801 = vpop.f32.mrb[0].mxu0
  %802 = vmatprep.mubr.f32.mxu0 0.0
  %803 = vmatmul.mubr.f32.gmra.mrb[0].mxu0 %v667
  %v804 = vpop.f32.mrb[0].mxu0
  %v805 = vadd.f32 %v612, %v804
  %v806 = vpop.f32.mrb[0].mxu0
  %807 = vmatprep.mubr.f32.mxu0 0.0
  %808 = vmatmul.mubr.f32.gmra.mrb[0].mxu0 %v670
  %v809 = vpop.f32.mrb[0].mxu0
  %v810 = vadd.f32 %v617, %v809
  %v811 = vpop.f32.mrb[0].mxu0
  %812 = vmatprep.mubr.f32.mxu0 0.0
  %813 = vmatmul.mubr.f32.gmra.mrb[0].mxu0 %v673
  %v814 = vpop.f32.mrb[0].mxu0
  %v815 = vadd.f32 %v622, %v814
  %v816 = vpop.f32.mrb[0].mxu0
  %817 = vmatprep.mubr.f32.mxu0 0.0
  %818 = vmatmul.mubr.f32.gmra.mrb[0].mxu0 %v676
  %v819 = vpop.f32.mrb[0].mxu0
  %v820 = vadd.f32 %v627, %v819
  %v821 = vpop.f32.mrb[0].mxu0
  %822 = vdwg.mxu0
  %v823 = vld [vmem:[%s3] sm:$0x1]
  %v825 = vlaneseq
  %v826 = vshrl.u32 %v825, 7
  %v827 = vsub.s32 0, %v826
  %v828 = vrot.slane %v823, %v827
  %v830 = vadd.f32 %v745, %v828
  %v831 = vadd.f32 %v750, %v828
  %v832 = vadd.f32 %v755, %v828
  %v833 = vadd.f32 %v760, %v828
  %v834 = vadd.f32 %v765, %v828
  %v835 = vadd.f32 %v770, %v828
  %v836 = vadd.f32 %v775, %v828
  %v837 = vadd.f32 %v780, %v828
  %v838 = vadd.f32 %v785, %v828
  %v839 = vadd.f32 %v790, %v828
  %v840 = vadd.f32 %v795, %v828
  %v841 = vadd.f32 %v800, %v828
  %v842 = vadd.f32 %v805, %v828
  %v843 = vadd.f32 %v810, %v828
  %v844 = vadd.f32 %v815, %v828
  %v845 = vadd.f32 %v820, %v828
  %846 = vst.msk [vmem:[%s4] sm:$0xff] %vm50, %v830
  %847 = vst.msk [vmem:[%s4 + $0x8] sm:$0xff] %vm50, %v831
  %848 = vst.msk [vmem:[%s4 + $0x10] sm:$0xff] %vm50, %v832
  %849 = vst.msk [vmem:[%s4 + $0x18] sm:$0xff] %vm50, %v833
  %850 = vst.msk [vmem:[%s4 + $0x20] sm:$0xff] %vm50, %v834
  %851 = vst.msk [vmem:[%s4 + $0x28] sm:$0xff] %vm50, %v835
  %852 = vst.msk [vmem:[%s4 + $0x30] sm:$0xff] %vm50, %v836
  %853 = vst.msk [vmem:[%s4 + $0x38] sm:$0xff] %vm50, %v837
  %854 = vst.msk [vmem:[%s4 + $0x40] sm:$0xff] %vm50, %v838
  %855 = vst.msk [vmem:[%s4 + $0x48] sm:$0xff] %vm50, %v839
  %856 = vst.msk [vmem:[%s4 + $0x50] sm:$0xff] %vm50, %v840
  %857 = vst.msk [vmem:[%s4 + $0x58] sm:$0xff] %vm50, %v841
  %858 = vst.msk [vmem:[%s4 + $0x60] sm:$0xff] %vm50, %v842
  %859 = vst.msk [vmem:[%s4 + $0x68] sm:$0xff] %vm50, %v843
  %860 = vst.msk [vmem:[%s4 + $0x70] sm:$0xff] %vm50, %v844
  %861 = vst.msk [vmem:[%s4 + $0x78] sm:$0xff] %vm50, %v845
  // Predicated region
  $region18: #{tpu_custom_call.1} parent=0 // pred_check
    _
  $region19: #{tpu_custom_call.1} parent=0 // pred_check_branch
    %863 = sbr.rel (0) target = $region21
  $region20: #{tpu_custom_call.1} parent=0 // pred_region
    _
  $region21: #{tpu_custom_call.1} parent=0 // pred_fallthru
    _
  // Predicated region
  $region22: #{tpu_custom_call.1} parent=0 // pred_check
    _
  $region23: #{tpu_custom_call.1} parent=0 // pred_check_branch
    %865 = sbr.rel (0) target = $region25
  $region24: #{tpu_custom_call.1} parent=0 // pred_region
    _
  $region25: #{tpu_custom_call.1} parent=0 // pred_fallthru
    _

</llo_original>
